<compile_context>
chip_gen: v7x
topology: tpu7x:2x2x1
jax: 0.10.0
libtpu: 0.0.40
codegen_flags: <defaults>
</compile_context>

<pallas_src>
import functools

import jax
import jax.numpy as jnp
from jax.experimental import pallas as pl
from jax.experimental.pallas import tpu as pltpu

LANE = 128
SUBLANE = 8
_WIDTH = 4 * LANE        # lane-dense tile width (multiple of 128)
_MAX_BLOCK_ROWS = 1024   # 1024 x 512 f32 = 2 MiB per block buffer


def _sine_kernel(x_ref, o_ref, *, w0):
    # Pure VPU multiply + EUP sin on the whole VMEM tile.
    o_ref[...] = jnp.sin(w0 * x_ref[...])


def sine(x, w0=1.0):
    """Elementwise sin(w0 * x) for an arbitrary-shaped floating array."""
    orig_shape = x.shape
    dtype = x.dtype
    n = x.size
    flat = x.reshape(-1)

    # Lay the data out lane-dense: (rows, 512), rows a multiple of 8.
    width = _WIDTH
    rows = max(1, -(-n // width))                  # ceil(n / width)
    rows = -(-rows // SUBLANE) * SUBLANE           # round up to sublane multiple
    block_rows = min(rows, _MAX_BLOCK_ROWS)
    n_blocks = -(-rows // block_rows)
    rows_padded = n_blocks * block_rows

    padded_elems = rows_padded * width
    if padded_elems != n:
        flat = jnp.pad(flat, (0, padded_elems - n))
    x2 = flat.reshape(rows_padded, width)

    out2 = pl.pallas_call(
        functools.partial(_sine_kernel, w0=float(w0)),
        out_shape=jax.ShapeDtypeStruct((rows_padded, width), dtype),
        grid=(n_blocks,),
        in_specs=[pl.BlockSpec((block_rows, width), lambda i: (i, 0))],
        out_specs=pl.BlockSpec((block_rows, width), lambda i: (i, 0)),
        compiler_params=pltpu.CompilerParams(
            dimension_semantics=("parallel",)),
    )(x2)

    return out2.reshape(-1)[:n].reshape(orig_shape)


def sine_ref(x, w0=1.0):
    """Pure-JAX reference mirroring torch.sin(w0 * x)."""
    return jnp.sin(w0 * x)


if __name__ == "__main__":
    key = jax.random.PRNGKey(0)
    x = jax.random.normal(key, (2, 4, 16, 16), dtype=jnp.float32)

    # default w0 = 1.0
    y = jax.block_until_ready(sine(x, w0=1.0))
    assert y.shape == x.shape
    assert jnp.allclose(y, sine_ref(x, 1.0), rtol=1e-5, atol=1e-5), \
        "mismatch vs reference (w0=1.0)"

    # non-default w0 (e.g. SIREN-style scaling)
    y30 = jax.block_until_ready(sine(x, w0=30.0))
    assert jnp.allclose(y30, sine_ref(x, 30.0), rtol=1e-5, atol=1e-5), \
        "mismatch vs reference (w0=30.0)"

    print("KERNEL_OK")
</pallas_src>

<mosaic_0001>
module attributes {stable_mosaic.version = 11 : i64} {
  func.func @_sine_kernel(%arg0: i32, %arg1: memref<8x512xf32, #tpu.memory_space<vmem>>, %arg2: memref<8x512xf32, #tpu.memory_space<vmem>>) attributes {dimension_semantics = [#tpu.dimension_semantics<parallel>], iteration_bounds = array<i64: 1>, scalar_prefetch = 0 : i64, scratch_operands = 0 : i64, tpu.core_type = #tpu.core_type<tc>, window_params = [{transform_indices = @transform_0, window_bounds = array<i64: 8, 512>}, {transform_indices = @transform_1, window_bounds = array<i64: 8, 512>}]} {
    %c0 = arith.constant 0 : index
    %c0_0 = arith.constant 0 : index
    %0 = vector.load %arg1[%c0, %c0_0] : memref<8x512xf32, #tpu.memory_space<vmem>>, vector<8x512xf32>
    %cst = arith.constant 1.000000e+00 : f32
    %1 = vector.broadcast %cst : f32 to vector<8x512xf32>
    %2 = arith.mulf %1, %0 : vector<8x512xf32>
    %3 = math.sin %2 : vector<8x512xf32>
    %c0_1 = arith.constant 0 : index
    %c0_2 = arith.constant 0 : index
    %4 = vector.load %arg2[%c0_1, %c0_2] : memref<8x512xf32, #tpu.memory_space<vmem>>, vector<8x512xf32>
    tpu.vector_store %arg2[%c0_1, %c0_2], %3 {strides = array<i32>} : memref<8x512xf32, #tpu.memory_space<vmem>>, vector<8x512xf32>,
    return
  }
  func.func @transform_0(%arg0: i32) -> (i32, i32) {
    %c0_i32 = arith.constant 0 : i32
    %c0_i32_0 = arith.constant 0 : i32
    return %arg0, %c0_i32 : i32, i32
  }
  func.func @transform_1(%arg0: i32) -> (i32, i32) {
    %c0_i32 = arith.constant 0 : i32
    %c0_i32_0 = arith.constant 0 : i32
    return %arg0, %c0_i32 : i32, i32
  }
}

</mosaic_0001>

<llo_original>
// kernel: tpu_custom_call.1
$region0: #{tpu_custom_call.1}
  #allocation0 [shape = 'u32[]', space=smem, size = 0x4, offset = 0x4, fixed_abs, tag = 'smem constant byte address 0x4 - core index']
  #allocation1 [shape = 'u32[144,128]{1,0:T(1,128)}', space=vmem, size = 0x12000, scoped, tag = 'internal scratch']
  %s0 = inlined_call_operand.hbm [shape: f32[8,512], index: 0, kind: input, shape index: {}]
  %s1 = inlined_call_operand.hbm [shape: f32[8,512], index: 1, kind: output, shape index: {}]
  %s2 = sld [smem:[#allocation0]]
  $region18: #{tpu_custom_call.1} parent=0
    _
  %s4 = ssub.s32 1, %s2
  %s5 = scalar_select 0, %s4, %s2
  $region1: #{tpu_custom_call.1} parent=0
    #allocation2 [shape = 'u8[16384]{0}', space=vmem, size = 0x4000, scoped, tag = 'input window, operand 0, single buffered']
    #allocation3 [shape = 's32[1]{0}', space=sflag, size = 0x4, scoped, tag = 'scoped memory for tpu_custom_call.1']
    #allocation4 [shape = 's32[1]{0}', space=sflag, size = 0x4, scoped, tag = 'scoped memory for tpu_custom_call.1']
    #allocation5 [shape = 'u8[16384]{0}', space=vmem, size = 0x4000, scoped, tag = 'output window, operand 0, single buffered']
    %6 = vsyncpa [#allocation3], 0
    %7 = vsyncpa [#allocation4], 0
    // Predicated region
    $region2: #{tpu_custom_call.1} parent=1 // pred_check
      _
    $region3: #{tpu_custom_call.1} parent=1 // pred_check_branch
      %9 = sbr.rel (0) target = $region5
    $region4: #{tpu_custom_call.1} parent=1 // pred_region
      %s11 = ssub.s32 512, 512
      %12 = vsyncadd [#allocation3], %s11
      %s14 = sshll.u32 [#allocation2], 4
      %s15 = int_to_ptr.vmem [resolvable:$true] %s14
      %17 = dma.hbm_to_vmem [thread:$0]  %s0, 512, %s15, [#allocation3]
    $region5: #{tpu_custom_call.1} parent=1 // pred_fallthru
      _
    // Predicated region
    $region6: #{tpu_custom_call.1} parent=1 // pred_check
      _
    $region7: #{tpu_custom_call.1} parent=1 // pred_check_branch
      %19 = sbr.rel (0) target = $region9
    $region8: #{tpu_custom_call.1} parent=1 // pred_region
      %20 = dma.done [#allocation3], 512
    $region9: #{tpu_custom_call.1} parent=1 // pred_fallthru
      _
    %v21 = vld [vmem:[#allocation2] sm:$0xff]
    %v22 = vld [vmem:[#allocation2 + $0x8] sm:$0xff]
    %v23 = vld [vmem:[#allocation2 + $0x10] sm:$0xff]
    %v24 = vld [vmem:[#allocation2 + $0x18] sm:$0xff]
    %v25 = vand.u32 2147483647, %v21
    %vm26 = vcmp.le.f32.partialorder %v25, 0.7853982
    %vm27 = vcmp.lt.s32.totalorder %v21, 0
    %v28 = vand.u32 %v21, 2139095040
    %v29 = vshrl.u32 %v28, 23
    %v30 = vsub.s32 %v29, 127
    %v31 = vand.u32 2147483647, %v21
    %v32 = vand.u32 %v31, 8388607
    %v33 = vor.u32 %v32, 8388608
    %v34 = vsub.s32 0, %v33
    %v35 = vadd.s32 %v30, 1
    %vm36 = vcmp.gt.s32.totalorder %v35, 0
    %v37 = vsel %vm36, %v35, 0
    %v38 = vshrl.u32 %v37, 5
    %v39 = vand.u32 %v37, 31
    %v40 = vsub.s32 32, %v39
    %v41 = vshrl.u32 683565275, %v40
    %v42 = vshll.u32 683565275, %v39
    %v43 = vshrl.u32 2475754826, %v40
    %v44 = vor.u32 %v42, %v43
    %v45 = vshll.u32 2475754826, %v39
    %v46 = vshrl.u32 2131351028, %v40
    %v47 = vor.u32 %v45, %v46
    %v48 = vshll.u32 2131351028, %v39
    %v49 = vshrl.u32 2102212464, %v40
    %v50 = vor.u32 %v48, %v49
    %v51 = vshll.u32 2102212464, %v39
    %v52 = vshrl.u32 920167782, %v40
    %v53 = vor.u32 %v51, %v52
    %v54 = vshll.u32 920167782, %v39
    %v55 = vshrl.u32 1326507024, %v40
    %v56 = vor.u32 %v54, %v55
    %vm57 = vcmp.lt.s32.totalorder %v38, 1
    %vm58 = vcmp.lt.s32.totalorder %v38, 2
    %vm59 = vcmp.lt.s32.totalorder %v38, 3
    %vm60 = vcmp.lt.s32.totalorder %v38, 4
    %v61 = vsel %vm57, %v41, %v44
    %v62 = vsel %vm60, %v50, 2102212464
    %v63 = vsel %vm59, %v47, %v62
    %v64 = vsel %vm58, %v61, %v63
    %v65 = vsel %vm57, %v44, %v47
    %v66 = vsel %vm60, %v53, 920167782
    %v67 = vsel %vm59, %v50, %v66
    %v68 = vsel %vm58, %v65, %v67
    %v69 = vsel %vm57, %v47, %v50
    %v70 = vsel %vm60, %v56, 1326507024
    %v71 = vsel %vm59, %v53, %v70
    %v72 = vsel %vm58, %v69, %v71
    %v73 = vshll.u32 %v33, 8
    %v74 = vmul.u32.u64.compose %v73, %v72
    %v75 = vextract.low.u32 %v74
    %v76 = vextract.high.u32 %v74
    %v77 = vmul.u32.u64.compose %v73, %v68
    %v78 = vextract.low.u32 %v77
    %v79 = vextract.high.u32 %v77
    %v80 = vmul.u32 %v73, %v64
    %v81 = vadd.s32 %v76, %v78
    %vm82 = vc.u32 %v76, %v78
    %v83 = vadd.s32 %v79, 1
    %v84 = vsel %vm82, %v83, %v79
    %v85 = vadd.s32 %v80, %v84
    %v86 = vadd.s32 %v85, 536870912
    %v87 = vshrl.u32 %v86, 30
    %v88 = vshll.u32 %v87, 30
    %v89 = vsub.s32 %v85, %v88
    %vm90 = vcmp.lt.s32.totalorder %v89, 0
    %v91 = vsub.s32 0, %v89
    %v92 = vsel %vm90, %v91, %v89
    %v93 = vclz %v92
    %v94 = vsub.s32 %v93, 2
    %vm95 = vcmp.gt.s32.totalorder 0, %v94
    %v96 = vsel %vm95, 0, %v94
    %v97 = vsub.s32 32, %v96
    %v98 = vshll.u32 %v89, %v96
    %v99 = vshrl.u32 %v81, %v97
    %v100 = vor.u32 %v98, %v99
    %v101 = vsub.s32 4294967266, %v96
    %v102 = vadd.s32 %v101, 127
    %v103 = vshll.u32 %v102, 23
    %v104 = vor.u32 4788187, %v103
    %v105 = vand.u32 2147483647, %v104
    %v107 = vcvt.s32.f32 %v100
    %v108 = vmul.f32 %v107, %v105
    %v109 = vxor.u32 %v108, 2147483648
    %v110 = vsel %vm27, %v109, %v108
    %v111 = vsub.s32 4, %v87
    %v112 = vsel %vm27, %v111, %v87
    %v113 = vsel %vm26, %v21, %v110
    %v114 = vsel %vm26, 0, %v112
    %v115 = vcosq.f32.pop %v113
    %v116 = vsinq.f32.pop %v113
    %vm117 = vweird.f32 %v21
    %v118 = vadd.s32 %v114, 3
    %v119 = vand.u32 %v118, 3
    %vm120 = vcmp.lt.s32.totalorder %v119, 2
    %vm121 = vcmp.eq.s32.totalorder %v119, 0
    %v122 = vxor.u32 %v116, 2147483648
    %v123 = vsel %vm121, %v115, %v122
    %vm124 = vcmp.eq.s32.totalorder %v119, 2
    %v125 = vxor.u32 %v115, 2147483648
    %v126 = vsel %vm124, %v125, %v116
    %v127 = vsel %vm120, %v123, %v126
    %v128 = vsel %vm117, nan, %v127
    %v129 = vand.u32 2147483647, %v22
    %vm130 = vcmp.le.f32.partialorder %v129, 0.7853982
    %vm131 = vcmp.lt.s32.totalorder %v22, 0
    %v132 = vand.u32 %v22, 2139095040
    %v133 = vshrl.u32 %v132, 23
    %v134 = vsub.s32 %v133, 127
    %v135 = vand.u32 2147483647, %v22
    %v136 = vand.u32 %v135, 8388607
    %v137 = vor.u32 %v136, 8388608
    %v138 = vsub.s32 0, %v137
    %v139 = vadd.s32 %v134, 1
    %vm140 = vcmp.gt.s32.totalorder %v139, 0
    %v141 = vsel %vm140, %v139, 0
    %v142 = vshrl.u32 %v141, 5
    %v143 = vand.u32 %v141, 31
    %v144 = vsub.s32 32, %v143
    %v145 = vshrl.u32 683565275, %v144
    %v146 = vshll.u32 683565275, %v143
    %v147 = vshrl.u32 2475754826, %v144
    %v148 = vor.u32 %v146, %v147
    %v149 = vshll.u32 2475754826, %v143
    %v150 = vshrl.u32 2131351028, %v144
    %v151 = vor.u32 %v149, %v150
    %v152 = vshll.u32 2131351028, %v143
    %v153 = vshrl.u32 2102212464, %v144
    %v154 = vor.u32 %v152, %v153
    %v155 = vshll.u32 2102212464, %v143
    %v156 = vshrl.u32 920167782, %v144
    %v157 = vor.u32 %v155, %v156
    %v158 = vshll.u32 920167782, %v143
    %v159 = vshrl.u32 1326507024, %v144
    %v160 = vor.u32 %v158, %v159
    %vm161 = vcmp.lt.s32.totalorder %v142, 1
    %vm162 = vcmp.lt.s32.totalorder %v142, 2
    %vm163 = vcmp.lt.s32.totalorder %v142, 3
    %vm164 = vcmp.lt.s32.totalorder %v142, 4
    %v165 = vsel %vm161, %v145, %v148
    %v166 = vsel %vm164, %v154, 2102212464
    %v167 = vsel %vm163, %v151, %v166
    %v168 = vsel %vm162, %v165, %v167
    %v169 = vsel %vm161, %v148, %v151
    %v170 = vsel %vm164, %v157, 920167782
    %v171 = vsel %vm163, %v154, %v170
    %v172 = vsel %vm162, %v169, %v171
    %v173 = vsel %vm161, %v151, %v154
    %v174 = vsel %vm164, %v160, 1326507024
    %v175 = vsel %vm163, %v157, %v174
    %v176 = vsel %vm162, %v173, %v175
    %v177 = vshll.u32 %v137, 8
    %v178 = vmul.u32.u64.compose %v177, %v176
    %v179 = vextract.low.u32 %v178
    %v180 = vextract.high.u32 %v178
    %v181 = vmul.u32.u64.compose %v177, %v172
    %v182 = vextract.low.u32 %v181
    %v183 = vextract.high.u32 %v181
    %v184 = vmul.u32 %v177, %v168
    %v185 = vadd.s32 %v180, %v182
    %vm186 = vc.u32 %v180, %v182
    %v187 = vadd.s32 %v183, 1
    %v188 = vsel %vm186, %v187, %v183
    %v189 = vadd.s32 %v184, %v188
    %v190 = vadd.s32 %v189, 536870912
    %v191 = vshrl.u32 %v190, 30
    %v192 = vshll.u32 %v191, 30
    %v193 = vsub.s32 %v189, %v192
    %vm194 = vcmp.lt.s32.totalorder %v193, 0
    %v195 = vsub.s32 0, %v193
    %v196 = vsel %vm194, %v195, %v193
    %v197 = vclz %v196
    %v198 = vsub.s32 %v197, 2
    %vm199 = vcmp.gt.s32.totalorder 0, %v198
    %v200 = vsel %vm199, 0, %v198
    %v201 = vsub.s32 32, %v200
    %v202 = vshll.u32 %v193, %v200
    %v203 = vshrl.u32 %v185, %v201
    %v204 = vor.u32 %v202, %v203
    %v205 = vsub.s32 4294967266, %v200
    %v206 = vadd.s32 %v205, 127
    %v207 = vshll.u32 %v206, 23
    %v208 = vor.u32 4788187, %v207
    %v209 = vand.u32 2147483647, %v208
    %v211 = vcvt.s32.f32 %v204
    %v212 = vmul.f32 %v211, %v209
    %v213 = vxor.u32 %v212, 2147483648
    %v214 = vsel %vm131, %v213, %v212
    %v215 = vsub.s32 4, %v191
    %v216 = vsel %vm131, %v215, %v191
    %v217 = vsel %vm130, %v22, %v214
    %v218 = vsel %vm130, 0, %v216
    %v219 = vcosq.f32.pop %v217
    %v220 = vsinq.f32.pop %v217
    %vm221 = vweird.f32 %v22
    %v222 = vadd.s32 %v218, 3
    %v223 = vand.u32 %v222, 3
    %vm224 = vcmp.lt.s32.totalorder %v223, 2
    %vm225 = vcmp.eq.s32.totalorder %v223, 0
    %v226 = vxor.u32 %v220, 2147483648
    %v227 = vsel %vm225, %v219, %v226
    %vm228 = vcmp.eq.s32.totalorder %v223, 2
    %v229 = vxor.u32 %v219, 2147483648
    %v230 = vsel %vm228, %v229, %v220
    %v231 = vsel %vm224, %v227, %v230
    %v232 = vsel %vm221, nan, %v231
    %v233 = vand.u32 2147483647, %v23
    %vm234 = vcmp.le.f32.partialorder %v233, 0.7853982
    %vm235 = vcmp.lt.s32.totalorder %v23, 0
    %v236 = vand.u32 %v23, 2139095040
    %v237 = vshrl.u32 %v236, 23
    %v238 = vsub.s32 %v237, 127
    %v239 = vand.u32 2147483647, %v23
    %v240 = vand.u32 %v239, 8388607
    %v241 = vor.u32 %v240, 8388608
    %v242 = vsub.s32 0, %v241
    %v243 = vadd.s32 %v238, 1
    %vm244 = vcmp.gt.s32.totalorder %v243, 0
    %v245 = vsel %vm244, %v243, 0
    %v246 = vshrl.u32 %v245, 5
    %v247 = vand.u32 %v245, 31
    %v248 = vsub.s32 32, %v247
    %v249 = vshrl.u32 683565275, %v248
    %v250 = vshll.u32 683565275, %v247
    %v251 = vshrl.u32 2475754826, %v248
    %v252 = vor.u32 %v250, %v251
    %v253 = vshll.u32 2475754826, %v247
    %v254 = vshrl.u32 2131351028, %v248
    %v255 = vor.u32 %v253, %v254
    %v256 = vshll.u32 2131351028, %v247
    %v257 = vshrl.u32 2102212464, %v248
    %v258 = vor.u32 %v256, %v257
    %v259 = vshll.u32 2102212464, %v247
    %v260 = vshrl.u32 920167782, %v248
    %v261 = vor.u32 %v259, %v260
    %v262 = vshll.u32 920167782, %v247
    %v263 = vshrl.u32 1326507024, %v248
    %v264 = vor.u32 %v262, %v263
    %vm265 = vcmp.lt.s32.totalorder %v246, 1
    %vm266 = vcmp.lt.s32.totalorder %v246, 2
    %vm267 = vcmp.lt.s32.totalorder %v246, 3
    %vm268 = vcmp.lt.s32.totalorder %v246, 4
    %v269 = vsel %vm265, %v249, %v252
    %v270 = vsel %vm268, %v258, 2102212464
    %v271 = vsel %vm267, %v255, %v270
    %v272 = vsel %vm266, %v269, %v271
    %v273 = vsel %vm265, %v252, %v255
    %v274 = vsel %vm268, %v261, 920167782
    %v275 = vsel %vm267, %v258, %v274
    %v276 = vsel %vm266, %v273, %v275
    %v277 = vsel %vm265, %v255, %v258
    %v278 = vsel %vm268, %v264, 1326507024
    %v279 = vsel %vm267, %v261, %v278
    %v280 = vsel %vm266, %v277, %v279
    %v281 = vshll.u32 %v241, 8
    %v282 = vmul.u32.u64.compose %v281, %v280
    %v283 = vextract.low.u32 %v282
    %v284 = vextract.high.u32 %v282
    %v285 = vmul.u32.u64.compose %v281, %v276
    %v286 = vextract.low.u32 %v285
    %v287 = vextract.high.u32 %v285
    %v288 = vmul.u32 %v281, %v272
    %v289 = vadd.s32 %v284, %v286
    %vm290 = vc.u32 %v284, %v286
    %v291 = vadd.s32 %v287, 1
    %v292 = vsel %vm290, %v291, %v287
    %v293 = vadd.s32 %v288, %v292
    %v294 = vadd.s32 %v293, 536870912
    %v295 = vshrl.u32 %v294, 30
    %v296 = vshll.u32 %v295, 30
    %v297 = vsub.s32 %v293, %v296
    %vm298 = vcmp.lt.s32.totalorder %v297, 0
    %v299 = vsub.s32 0, %v297
    %v300 = vsel %vm298, %v299, %v297
    %v301 = vclz %v300
    %v302 = vsub.s32 %v301, 2
    %vm303 = vcmp.gt.s32.totalorder 0, %v302
    %v304 = vsel %vm303, 0, %v302
    %v305 = vsub.s32 32, %v304
    %v306 = vshll.u32 %v297, %v304
    %v307 = vshrl.u32 %v289, %v305
    %v308 = vor.u32 %v306, %v307
    %v309 = vsub.s32 4294967266, %v304
    %v310 = vadd.s32 %v309, 127
    %v311 = vshll.u32 %v310, 23
    %v312 = vor.u32 4788187, %v311
    %v313 = vand.u32 2147483647, %v312
    %v315 = vcvt.s32.f32 %v308
    %v316 = vmul.f32 %v315, %v313
    %v317 = vxor.u32 %v316, 2147483648
    %v318 = vsel %vm235, %v317, %v316
    %v319 = vsub.s32 4, %v295
    %v320 = vsel %vm235, %v319, %v295
    %v321 = vsel %vm234, %v23, %v318
    %v322 = vsel %vm234, 0, %v320
    %v323 = vcosq.f32.pop %v321
    %v324 = vsinq.f32.pop %v321
    %vm325 = vweird.f32 %v23
    %v326 = vadd.s32 %v322, 3
    %v327 = vand.u32 %v326, 3
    %vm328 = vcmp.lt.s32.totalorder %v327, 2
    %vm329 = vcmp.eq.s32.totalorder %v327, 0
    %v330 = vxor.u32 %v324, 2147483648
    %v331 = vsel %vm329, %v323, %v330
    %vm332 = vcmp.eq.s32.totalorder %v327, 2
    %v333 = vxor.u32 %v323, 2147483648
    %v334 = vsel %vm332, %v333, %v324
    %v335 = vsel %vm328, %v331, %v334
    %v336 = vsel %vm325, nan, %v335
    %v337 = vand.u32 2147483647, %v24
    %vm338 = vcmp.le.f32.partialorder %v337, 0.7853982
    %vm339 = vcmp.lt.s32.totalorder %v24, 0
    %v340 = vand.u32 %v24, 2139095040
    %v341 = vshrl.u32 %v340, 23
    %v342 = vsub.s32 %v341, 127
    %v343 = vand.u32 2147483647, %v24
    %v344 = vand.u32 %v343, 8388607
    %v345 = vor.u32 %v344, 8388608
    %v346 = vsub.s32 0, %v345
    %v347 = vadd.s32 %v342, 1
    %vm348 = vcmp.gt.s32.totalorder %v347, 0
    %v349 = vsel %vm348, %v347, 0
    %v350 = vshrl.u32 %v349, 5
    %v351 = vand.u32 %v349, 31
    %v352 = vsub.s32 32, %v351
    %v353 = vshrl.u32 683565275, %v352
    %v354 = vshll.u32 683565275, %v351
    %v355 = vshrl.u32 2475754826, %v352
    %v356 = vor.u32 %v354, %v355
    %v357 = vshll.u32 2475754826, %v351
    %v358 = vshrl.u32 2131351028, %v352
    %v359 = vor.u32 %v357, %v358
    %v360 = vshll.u32 2131351028, %v351
    %v361 = vshrl.u32 2102212464, %v352
    %v362 = vor.u32 %v360, %v361
    %v363 = vshll.u32 2102212464, %v351
    %v364 = vshrl.u32 920167782, %v352
    %v365 = vor.u32 %v363, %v364
    %v366 = vshll.u32 920167782, %v351
    %v367 = vshrl.u32 1326507024, %v352
    %v368 = vor.u32 %v366, %v367
    %vm369 = vcmp.lt.s32.totalorder %v350, 1
    %vm370 = vcmp.lt.s32.totalorder %v350, 2
    %vm371 = vcmp.lt.s32.totalorder %v350, 3
    %vm372 = vcmp.lt.s32.totalorder %v350, 4
    %v373 = vsel %vm369, %v353, %v356
    %v374 = vsel %vm372, %v362, 2102212464
    %v375 = vsel %vm371, %v359, %v374
    %v376 = vsel %vm370, %v373, %v375
    %v377 = vsel %vm369, %v356, %v359
    %v378 = vsel %vm372, %v365, 920167782
    %v379 = vsel %vm371, %v362, %v378
    %v380 = vsel %vm370, %v377, %v379
    %v381 = vsel %vm369, %v359, %v362
    %v382 = vsel %vm372, %v368, 1326507024
    %v383 = vsel %vm371, %v365, %v382
    %v384 = vsel %vm370, %v381, %v383
    %v385 = vshll.u32 %v345, 8
    %v386 = vmul.u32.u64.compose %v385, %v384
    %v387 = vextract.low.u32 %v386
    %v388 = vextract.high.u32 %v386
    %v389 = vmul.u32.u64.compose %v385, %v380
    %v390 = vextract.low.u32 %v389
    %v391 = vextract.high.u32 %v389
    %v392 = vmul.u32 %v385, %v376
    %v393 = vadd.s32 %v388, %v390
    %vm394 = vc.u32 %v388, %v390
    %v395 = vadd.s32 %v391, 1
    %v396 = vsel %vm394, %v395, %v391
    %v397 = vadd.s32 %v392, %v396
    %v398 = vadd.s32 %v397, 536870912
    %v399 = vshrl.u32 %v398, 30
    %v400 = vshll.u32 %v399, 30
    %v401 = vsub.s32 %v397, %v400
    %vm402 = vcmp.lt.s32.totalorder %v401, 0
    %v403 = vsub.s32 0, %v401
    %v404 = vsel %vm402, %v403, %v401
    %v405 = vclz %v404
    %v406 = vsub.s32 %v405, 2
    %vm407 = vcmp.gt.s32.totalorder 0, %v406
    %v408 = vsel %vm407, 0, %v406
    %v409 = vsub.s32 32, %v408
    %v410 = vshll.u32 %v401, %v408
    %v411 = vshrl.u32 %v393, %v409
    %v412 = vor.u32 %v410, %v411
    %v413 = vsub.s32 4294967266, %v408
    %v414 = vadd.s32 %v413, 127
    %v415 = vshll.u32 %v414, 23
    %v416 = vor.u32 4788187, %v415
    %v417 = vand.u32 2147483647, %v416
    %v419 = vcvt.s32.f32 %v412
    %v420 = vmul.f32 %v419, %v417
    %v421 = vxor.u32 %v420, 2147483648
    %v422 = vsel %vm339, %v421, %v420
    %v423 = vsub.s32 4, %v399
    %v424 = vsel %vm339, %v423, %v399
    %v425 = vsel %vm338, %v24, %v422
    %v426 = vsel %vm338, 0, %v424
    %v427 = vcosq.f32.pop %v425
    %v428 = vsinq.f32.pop %v425
    %vm429 = vweird.f32 %v24
    %v430 = vadd.s32 %v426, 3
    %v431 = vand.u32 %v430, 3
    %vm432 = vcmp.lt.s32.totalorder %v431, 2
    %vm433 = vcmp.eq.s32.totalorder %v431, 0
    %v434 = vxor.u32 %v428, 2147483648
    %v435 = vsel %vm433, %v427, %v434
    %vm436 = vcmp.eq.s32.totalorder %v431, 2
    %v437 = vxor.u32 %v427, 2147483648
    %v438 = vsel %vm436, %v437, %v428
    %v439 = vsel %vm432, %v435, %v438
    %v440 = vsel %vm429, nan, %v439
    %441 = vst [vmem:[#allocation5] sm:$0xff] %v128
    %442 = vst [vmem:[#allocation5 + $0x8] sm:$0xff] %v232
    %443 = vst [vmem:[#allocation5 + $0x10] sm:$0xff] %v336
    %444 = vst [vmem:[#allocation5 + $0x18] sm:$0xff] %v440
    // Predicated region
    $region10: #{tpu_custom_call.1} parent=1 // pred_check
      _
    $region11: #{tpu_custom_call.1} parent=1 // pred_check_branch
      %446 = sbr.rel (0) target = $region13
    $region12: #{tpu_custom_call.1} parent=1 // pred_region
      %s448 = ssub.s32 512, 512
      %449 = vsyncadd [#allocation4], %s448
      %s451 = sshll.u32 [#allocation5], 4
      %s452 = int_to_ptr.vmem [resolvable:$true] %s451
      %454 = dma.vmem_to_hbm [thread:$0]  %s452, 512, %s1, [#allocation4]
    $region13: #{tpu_custom_call.1} parent=1 // pred_fallthru
      _
    // Predicated region
    $region14: #{tpu_custom_call.1} parent=1 // pred_check
      _
    $region15: #{tpu_custom_call.1} parent=1 // pred_check_branch
      %456 = sbr.rel (0) target = $region17
    $region16: #{tpu_custom_call.1} parent=1 // pred_region
      %457 = dma.done [#allocation4], 512
    $region17: #{tpu_custom_call.1} parent=1 // pred_fallthru
      _
    %458 = vsyncpa [#allocation3], 1
    %459 = vsyncpa [#allocation4], 1

</llo_original>
